<compile_context>
chip_gen: v7x
topology: tpu7x:2x2x1
jax: 0.10.0
libtpu: 0.0.40
codegen_flags: <defaults>
</compile_context>

<pallas_src>
import math

import jax
import jax.numpy as jnp
from jax.experimental import pallas as pl
from jax.experimental.pallas import tpu as pltpu


def _round_up(n, m):
    return ((n + m - 1) // m) * m


def _fused_linear_softmax_kernel(x_ref, wd_ref, bd_ref, o_ref):
    x = x_ref[...].astype(jnp.float32)                       # (TM, ch)
    # Single N=1 matmul: logit difference d = l1 - l0.
    d = jnp.dot(x, wd_ref[...], preferred_element_type=jnp.float32) + bd_ref[...]
    # 2-class softmax == sigmoid of the logit difference; rows sum to 1 exactly.
    p0 = 1.0 / (1.0 + jnp.exp(d))                            # (TM, 1)
    o_ref[...] = jnp.concatenate([p0, 1.0 - p0], axis=-1).astype(o_ref.dtype)
    # TODO(synk): a transposed lane-dense (2, B) output store would turn the
    # 2-lane masked vst into full-width vst; output volume is tiny so skipped.


def _collapse_params(params):
    (w0, b0), (w1, b1), (w2, b2), (w3, b3) = (
        params["l0"], params["l1"], params["l2"], params["fc"])
    w_eff = w0 @ w1 @ w2 @ w3                                 # [ch, 2]
    b_eff = ((b0 @ w1 + b1) @ w2 + b2) @ w3 + b3              # [1, 2]
    w_diff = w_eff[:, 1:2] - w_eff[:, 0:1]                    # [ch, 1]
    b_diff = b_eff[:, 1:2] - b_eff[:, 0:1]                    # [1, 1]
    return w_diff, b_diff


@jax.jit
def net_forward(x, params):
    """x: [B, ch] float32. params: dict of (W, b) with W stored as [in, out]."""
    B, ch = x.shape
    w_diff, b_diff = _collapse_params(params)   # tiny, done once outside the kernel

    # --- batch tile sizing (generation-aware, VMEM-byte budget) ---
    # ~4 MiB x tile -> ~8 MiB double-buffered, well inside the 32 MiB scoped
    # VMEM default on v5e/v6e/v7x; big enough to amortize per-grid-step cost.
    target_tile_bytes = 4 * 1024 * 1024
    tm = max(8, (target_tile_bytes // (ch * 4)) // 8 * 8)
    tm = min(tm, 32768, _round_up(B, 8))
    if B > 16:
        # Ensure >= 2 grid steps so the "parallel" axis can shard across
        # v7x's two TensorCores (no-op when B already spans many tiles).
        tm = min(tm, _round_up((B + 1) // 2, 8))
    grid = (pl.cdiv(B, tm),)   # no padding: Pallas masks the partial last block

    cost = pl.CostEstimate(
        flops=2 * B * ch,                     # x @ w_diff
        transcendentals=B,                    # one exp per row
        bytes_accessed=B * ch * 4 + B * 2 * 4 + ch * 4 + 4,
    )

    out = pl.pallas_call(
        _fused_linear_softmax_kernel,
        out_shape=jax.ShapeDtypeStruct((B, 2), jnp.float32),
        grid=grid,
        in_specs=[
            pl.BlockSpec((tm, ch), lambda i: (i, 0)),   # x: streamed, double-buffered
            pl.BlockSpec((ch, 1), lambda i: (0, 0)),    # w_diff: VMEM-resident
            pl.BlockSpec((1, 1), lambda i: (0, 0)),     # b_diff: VMEM-resident
        ],
        out_specs=pl.BlockSpec((tm, 2), lambda i: (i, 0)),
        compiler_params=pltpu.CompilerParams(
            dimension_semantics=("parallel",)),          # shards batch over TCs
        cost_estimate=cost,
    )(x, w_diff, b_diff)
    return out


def init_params(key, ch):
    """Deterministic init matching nn.Linear's U(-1/sqrt(in), 1/sqrt(in))."""
    dims = [(ch, 128), (128, 64), (64, 16), (16, 2)]
    names = ["l0", "l1", "l2", "fc"]
    params = {}
    for name, (fan_in, fan_out) in zip(names, dims):
        key, kw, kb = jax.random.split(key, 3)
        bound = 1.0 / math.sqrt(fan_in)
        w = jax.random.uniform(kw, (fan_in, fan_out), jnp.float32, -bound, bound)
        b = jax.random.uniform(kb, (1, fan_out), jnp.float32, -bound, bound)
        params[name] = (w, b)
    return params


def _reference(x, params):
    h = x
    for name in ["l0", "l1", "l2", "fc"]:
        w, b = params[name]
        h = h @ w + b
    return jax.nn.softmax(h, axis=-1)


if __name__ == "__main__":
    B, CH = 8, 32
    key = jax.random.PRNGKey(0)
    key, kx = jax.random.split(key)
    x = jax.random.normal(kx, (B, CH), dtype=jnp.float32)
    params = init_params(key, CH)

    out = net_forward(x, params)
    jax.block_until_ready(out)

    assert out.shape == (B, 2)
    # rows of a softmax must sum to 1
    assert bool(jnp.allclose(jnp.sum(out, axis=-1), 1.0, atol=1e-5))
    # matches the un-collapsed 4-linear + softmax reference (fp reassociation
    # from the collapse allows a small tolerance)
    ref = _reference(x, params)
    assert bool(jnp.allclose(out, ref, atol=2e-3, rtol=2e-3))
    print("KERNEL_OK")
</pallas_src>

<mosaic_0001>
module attributes {stable_mosaic.version = 11 : i64} {
  func.func @_fused_linear_softmax_kernel(%arg0: i32, %arg1: memref<8x32xf32, #tpu.memory_space<vmem>>, %arg2: memref<32x1xf32, #tpu.memory_space<vmem>>, %arg3: memref<1x1xf32, #tpu.memory_space<vmem>>, %arg4: memref<8x2xf32, #tpu.memory_space<vmem>>) attributes {dimension_semantics = [#tpu.dimension_semantics<parallel>], iteration_bounds = array<i64: 1>, scalar_prefetch = 0 : i64, scratch_operands = 0 : i64, tpu.core_type = #tpu.core_type<tc>, window_params = [{transform_indices = @transform_0, window_bounds = array<i64: 8, 32>}, {pipeline_mode = #tpu.pipeline_mode<synchronous>, transform_indices = @transform_1, window_bounds = array<i64: 32, 1>}, {pipeline_mode = #tpu.pipeline_mode<synchronous>, transform_indices = @transform_2, window_bounds = array<i64: 1, 1>}, {transform_indices = @transform_3, window_bounds = array<i64: 8, 2>}]} {
    %c0 = arith.constant 0 : index
    %c0_0 = arith.constant 0 : index
    %0 = vector.load %arg1[%c0, %c0_0] : memref<8x32xf32, #tpu.memory_space<vmem>>, vector<8x32xf32>
    %c0_1 = arith.constant 0 : index
    %c0_2 = arith.constant 0 : index
    %1 = vector.load %arg2[%c0_1, %c0_2] : memref<32x1xf32, #tpu.memory_space<vmem>>, vector<32x1xf32>
    %cst = arith.constant dense<0.000000e+00> : vector<8x1xf32>
    %2 = tpu.matmul %0, %1, %cst {dimension_numbers = #tpu.dot_dimension_numbers<[1], [0], [0], [1], [0, 0, 1, 1], [], []>} : vector<8x32xf32>, vector<32x1xf32>, vector<8x1xf32> -> vector<8x1xf32>
    %c0_3 = arith.constant 0 : index
    %c0_4 = arith.constant 0 : index
    %3 = vector.load %arg3[%c0_3, %c0_4] : memref<1x1xf32, #tpu.memory_space<vmem>>, vector<1x1xf32>
    %4 = vector.broadcast %3 : vector<1x1xf32> to vector<8x1xf32>
    %5 = arith.addf %2, %4 : vector<8x1xf32>
    %6 = math.exp %5 : vector<8x1xf32>
    %cst_5 = arith.constant 1.000000e+00 : f32
    %7 = vector.broadcast %cst_5 : f32 to vector<8x1xf32>
    %8 = arith.addf %7, %6 : vector<8x1xf32>
    %cst_6 = arith.constant 1.000000e+00 : f32
    %9 = vector.broadcast %cst_6 : f32 to vector<8x1xf32>
    %10 = arith.divf %9, %8 : vector<8x1xf32>
    %cst_7 = arith.constant 1.000000e+00 : f32
    %11 = vector.broadcast %cst_7 : f32 to vector<8x1xf32>
    %12 = arith.subf %11, %10 : vector<8x1xf32>
    %13 = tpu.concatenate %10, %12 in 1 : vector<8x1xf32>, vector<8x1xf32> -> vector<8x2xf32>
    %c0_8 = arith.constant 0 : index
    %c0_9 = arith.constant 0 : index
    %14 = vector.load %arg4[%c0_8, %c0_9] : memref<8x2xf32, #tpu.memory_space<vmem>>, vector<8x2xf32>
    tpu.vector_store %arg4[%c0_8, %c0_9], %13 {strides = array<i32>} : memref<8x2xf32, #tpu.memory_space<vmem>>, vector<8x2xf32>,
    return
  }
  func.func @transform_0(%arg0: i32) -> (i32, i32) {
    %c0_i32 = arith.constant 0 : i32
    %c0_i32_0 = arith.constant 0 : i32
    return %arg0, %c0_i32 : i32, i32
  }
  func.func @transform_1(%arg0: i32) -> (i32, i32) {
    %c0_i32 = arith.constant 0 : i32
    %c0_i32_0 = arith.constant 0 : i32
    %c0_i32_1 = arith.constant 0 : i32
    return %c0_i32, %c0_i32_0 : i32, i32
  }
  func.func @transform_2(%arg0: i32) -> (i32, i32) {
    %c0_i32 = arith.constant 0 : i32
    %c0_i32_0 = arith.constant 0 : i32
    %c0_i32_1 = arith.constant 0 : i32
    return %c0_i32, %c0_i32_0 : i32, i32
  }
  func.func @transform_3(%arg0: i32) -> (i32, i32) {
    %c0_i32 = arith.constant 0 : i32
    %c0_i32_0 = arith.constant 0 : i32
    return %arg0, %c0_i32 : i32, i32
  }
}

</mosaic_0001>

<llo_original>
// kernel: net_forward.1
$region0: #{net_forward.1}
  #allocation0 [shape = 'u32[]', space=smem, size = 0x4, offset = 0x4, fixed_abs, tag = 'smem constant byte address 0x4 - core index']
  #allocation1 [shape = 'u32[144,128]{1,0:T(1,128)}', space=vmem, size = 0x12000, scoped, tag = 'internal scratch']
  #allocation2 [shape = 'f32[1,1]{1,0:T(1,128)S(1)}', space=vmem, size = 0x200, scoped, tag = 'scoped memory for net_forward.1']
  %s0 = inlined_call_operand.vmem [shape: f32[8,32], index: 0, kind: input, shape index: {}]
  %s1 = inlined_call_operand.vmem [shape: f32[32,1], index: 1, kind: input, shape index: {}]
  %s2 = inlined_call_operand.<no memory space> [shape: f32[1,1], index: 2, kind: input, shape index: {}]
  %s3 = inlined_call_operand.vmem [shape: f32[8,2], index: 3, kind: output, shape index: {}]
  %s4 = sld [smem:[#allocation0]]
  $region22: #{net_forward.1} parent=0
    _
  %s6 = ssub.s32 1, %s4
  %s7 = scalar_select 0, %s6, %s4
  %v8 = vstv %s2
  %9 = vst [vmem:[#allocation2] sm:$0x1] %v8
  // Predicated region
  $region2: #{net_forward.1} parent=0 // pred_check
    _
  $region3: #{net_forward.1} parent=0 // pred_check_branch
    %11 = sbr.rel (0) target = $region5
  $region4: #{net_forward.1} parent=0 // pred_region
    _
  $region5: #{net_forward.1} parent=0 // pred_fallthru
    _
  // Predicated region
  $region6: #{net_forward.1} parent=0 // pred_check
    _
  $region7: #{net_forward.1} parent=0 // pred_check_branch
    %13 = sbr.rel (0) target = $region9
  $region8: #{net_forward.1} parent=0 // pred_region
    _
  $region9: #{net_forward.1} parent=0 // pred_fallthru
    _
  // Predicated region
  $region10: #{net_forward.1} parent=0 // pred_check
    _
  $region11: #{net_forward.1} parent=0 // pred_check_branch
    %15 = sbr.rel (0) target = $region13
  $region12: #{net_forward.1} parent=0 // pred_region
    _
  $region13: #{net_forward.1} parent=0 // pred_fallthru
    _
  %v16 = vld [vmem:[%s0] sm:$0xff]
  %v17 = vld [vmem:[%s1] sm:$0xff]
  %v18 = vld [vmem:[%s1 + $0x8] sm:$0xff]
  %v19 = vld [vmem:[%s1 + $0x10] sm:$0xff]
  %v20 = vld [vmem:[%s1 + $0x18] sm:$0xff]
  %v21 = vld [vmem:[#allocation2] sm:$0x1]
  %v23 = vlaneseq
  %v24 = vshrl.u32 %v23, 7
  %v25 = vsub.s32 0, %v24
  %v26 = vrot.slane %v21, %v25
  %vm28 = vcmask 261120
  %v30 = vsel %vm28, %v16, 0
  %32 = vmatprep.subr.mxu0 0.0
  %33 = vmatpush1.msra.mxu0 %v17
  %34 = vmatprep.subr.mxu0 0.0
  %35 = vmatpush1.msra.mxu0 %v18
  %36 = vmatprep.subr.mxu0 0.0
  %37 = vmatpush1.msra.mxu0 %v19
  %38 = vmatprep.subr.mxu0 0.0
  %39 = vmatpush1.msra.mxu0 %v20
  %40 = vmatprep.subr.mxu0 0.0
  %41 = vmatpush1.msra.mxu0 0.0
  %42 = vmatprep.subr.mxu0 0.0
  %43 = vmatpush1.msra.mxu0 0.0
  %44 = vmatprep.subr.mxu0 0.0
  %45 = vmatpush1.msra.mxu0 0.0
  %46 = vmatprep.subr.mxu0 0.0
  %47 = vmatpush1.msra.mxu0 0.0
  %48 = vmatprep.subr.mxu0 0.0
  %49 = vmatpush1.msra.mxu0 0.0
  %50 = vmatprep.subr.mxu0 0.0
  %51 = vmatpush1.msra.mxu0 0.0
  %52 = vmatprep.subr.mxu0 0.0
  %53 = vmatpush1.msra.mxu0 0.0
  %54 = vmatprep.subr.mxu0 0.0
  %55 = vmatpush1.msra.mxu0 0.0
  %56 = vmatprep.subr.mxu0 0.0
  %57 = vmatpush1.msra.mxu0 0.0
  %58 = vmatprep.subr.mxu0 0.0
  %59 = vmatpush1.msra.mxu0 0.0
  %60 = vmatprep.subr.mxu0 0.0
  %61 = vmatpush1.msra.mxu0 0.0
  %62 = vmatprep.subr.mxu0 0.0
  %63 = vmatpush1.msra.mxu0 0.0
  %64 = vmatprep.subr.mxu0 0.0
  %65 = vmatpush1.msra.mxu0 0.0
  %66 = vmatprep.subr.mxu0 0.0
  %67 = vmatpush1.msra.mxu0 0.0
  %68 = vmatprep.subr.mxu0 0.0
  %69 = vmatpush1.msra.mxu0 0.0
  %70 = vmatprep.subr.mxu0 0.0
  %71 = vmatpush1.msra.mxu0 0.0
  %72 = vmatprep.subr.mxu0 0.0
  %73 = vmatpush1.msra.mxu0 0.0
  %74 = vmatprep.subr.mxu0 0.0
  %75 = vmatpush1.msra.mxu0 0.0
  %76 = vmatprep.subr.mxu0 0.0
  %77 = vmatpush1.msra.mxu0 0.0
  %78 = vmatprep.subr.mxu0 0.0
  %79 = vmatpush1.msra.mxu0 0.0
  %80 = vmatprep.subr.mxu0 0.0
  %81 = vmatpush1.msra.mxu0 0.0
  %82 = vmatprep.subr.mxu0 0.0
  %83 = vmatpush1.msra.mxu0 0.0
  %84 = vmatprep.subr.mxu0 0.0
  %85 = vmatpush1.msra.mxu0 0.0
  %86 = vmatprep.subr.mxu0 0.0
  %87 = vmatpush1.msra.mxu0 0.0
  %88 = vmatprep.subr.mxu0 0.0
  %89 = vmatpush1.msra.mxu0 0.0
  %90 = vmatprep.subr.mxu0 0.0
  %91 = vmatpush1.msra.mxu0 0.0
  %92 = vmatprep.subr.mxu0 0.0
  %93 = vmatpush1.msra.mxu0 0.0
  %94 = vmatprep.subr.mxu0 0.0
  %95 = vmatpush1.msra.mxu0 0.0
  %96 = vmatprep.mubr.f32.mxu0 0.0
  %97 = vmatmul.mubr.f32.gmra.mrb[0].mxu0 %v30
  %v98 = vpop.f32.mrb[0].mxu0
  %v99 = vadd.f32 %v26, %v98
  %v100 = vpop.f32.mrb[0].mxu0
  %101 = vdwg.mxu0
  %v102 = vmul.f32 %v99, 1.442695
  %v103 = vpow.pop %v102
  %v104 = vadd.f32 %v103, 1.0
  %v105 = vrcp.pop %v104
  %v106 = vmul.f32 1.0, %v105
  %v107 = vsub.f32 1.0, %v106
  %109 = vrot.lane.b32.xlu0 %v107, 1
  %v110 = vpop.permute.xlu0 %109
  %vm112 = vcmask 7168
  %v113 = vsel %vm112, %v106, %v110
  %vm114 = vcmask 15360
  %115 = vst.msk [vmem:[%s3] sm:$0xff] %vm114, %v113
  // Predicated region
  $region14: #{net_forward.1} parent=0 // pred_check
    _
  $region15: #{net_forward.1} parent=0 // pred_check_branch
    %117 = sbr.rel (0) target = $region17
  $region16: #{net_forward.1} parent=0 // pred_region
    _
  $region17: #{net_forward.1} parent=0 // pred_fallthru
    _
  // Predicated region
  $region18: #{net_forward.1} parent=0 // pred_check
    _
  $region19: #{net_forward.1} parent=0 // pred_check_branch
    %119 = sbr.rel (0) target = $region21
  $region20: #{net_forward.1} parent=0 // pred_region
    _
  $region21: #{net_forward.1} parent=0 // pred_fallthru
    _

</llo_original>
